<compile_context>
chip_gen: v5e
topology: v5e:2x2
jax: 0.10.0
libtpu: 0.0.40
codegen_flags: <defaults>
</compile_context>

<pallas_src>
import functools
import math

import jax
import jax.numpy as jnp
from jax.experimental import pallas as pl
from jax.experimental.pallas import tpu as pltpu


def _choose_block_batch(B, S, max_rows=1024):
    """Pick TB (batch rows per grid step): a divisor of B with TB*S <= max_rows,
    preferring >= 2 grid steps (both v7x TensorCores get work) and sublane-dense TB."""
    divisors = [d for d in range(1, B + 1) if B % d == 0]
    fits = [d for d in divisors if d * S <= max_rows] or [1]

    def score(d):
        return ((B // d) >= 2,              # at least two grid steps
                d % 8 == 0 or d == B,       # sublane-dense output block
                d * S)                      # then: biggest MXU M block
    return max(fits, key=score)


def _fused_cnn_kernel(x_ref, w_ref, b_ref, o_ref, *,
                      kernel_size, kernel_num, seq_len, block_batch):
    """im2col conv (all kernel sizes at once) + masked global max-pool for TB batch rows.

    x_ref: (TB, S, D)            f32   TB batch rows (grid axis = batch blocks, parallel)
    w_ref: (max_ks*D, G*K)       bf16  zero-padded im2col weights, all kernel sizes packed on lanes
    b_ref: (1, G*K)              f32   packed conv biases
    o_ref: (1, TB, G*K)          f32   pooled features for this batch block (dense store)
    """
    S, K, TB = seq_len, kernel_num, block_batch
    G = len(kernel_size)
    max_ks = max(kernel_size)
    D = x_ref.shape[-1]
    N = TB * S

    # (TB, S, D) -> (TB*S, D): layout-free sublane merge because S % 8 == 0.
    x = x_ref[...].reshape(N, D)

    # In-VMEM im2col: slab[:, dt*D:(dt+1)*D] holds x_flat[(r + dt) % N] at row r.
    # XLU sublane rotations (f32, arbitrary shift); wrap-around / cross-row rows only reach
    # conv positions that are masked to -inf below.
    cols = [x]
    for dt in range(1, max_ks):
        cols.append(pltpu.roll(x, shift=N - dt, axis=0))
    xi = jnp.concatenate(cols, axis=1).astype(jnp.bfloat16)            # (N, max_ks*D) bf16

    # One MXU sweep covers every tap of every kernel size; f32 accumulation.
    y = jnp.dot(xi, w_ref[...], preferred_element_type=jnp.float32)    # (N, G*K) f32
    y = y.reshape(TB, S, G * K)                                        # layout-free (S % 8 == 0)

    # Global max-pool over the valid conv positions t <= S - ks of each kernel-size group.
    t_idx = jax.lax.broadcasted_iota(jnp.int32, (TB, S, 1), 1)
    pooled = []
    for g, ks in enumerate(kernel_size):                               # static unrolled (G small)
        yg = y[:, :, g * K:(g + 1) * K]                                # lane-aligned (K % 128 == 0)
        yg = jnp.where(t_idx <= (S - ks), yg, -jnp.inf)
        pooled.append(jnp.max(yg, axis=1))                             # (TB, K)

    # Bias after the pool is exact: no nonlinearity between conv and max-pool in the reference.
    o_ref[0] = jnp.concatenate(pooled, axis=1) + b_ref[...]            # dense (TB, G*K) store


def fused_cnn_maxpool(x_bsd, w_packed, bias_packed, kernel_size, kernel_num, *,
                      block_batch=None):
    """All conv kernel sizes + global max pool in one pallas_call.

    x_bsd:       (B, S, D)            f32  (cast to bf16 inside the kernel)
    w_packed:    (max_ks*D, G*K)      bf16 zero-padded im2col weights
    bias_packed: (1, G*K)             f32
    returns:     (B, G*K)             f32
    """
    B, S, D = x_bsd.shape
    G = len(kernel_size)
    K = kernel_num
    max_ks = max(kernel_size)
    KD, gk = w_packed.shape
    assert KD == max_ks * D and gk == G * K, "packed weight shape mismatch"
    # Layout guards (perf): lane-aligned K column slices and layout-free (TB, S) sublane merges.
    assert K % 128 == 0, "kernel_num must be a multiple of 128 (pad channels upstream)"
    assert S % 8 == 0, "sequence length must be a multiple of 8 (pad upstream)"
    assert S >= max_ks, "sequence length shorter than the largest conv kernel"

    TB = block_batch if block_batch is not None else _choose_block_batch(B, S)
    assert B % TB == 0, "block_batch must divide the batch size"
    nsteps = B // TB

    flops = 2 * B * S * KD * gk                      # dominated by the packed im2col matmul
    bytes_accessed = (x_bsd.size * x_bsd.dtype.itemsize
                      + w_packed.size * w_packed.dtype.itemsize
                      + bias_packed.size * 4
                      + B * gk * 4)

    out = pl.pallas_call(
        functools.partial(_fused_cnn_kernel,
                          kernel_size=tuple(kernel_size), kernel_num=K,
                          seq_len=S, block_batch=TB),
        # Output shaped (steps, TB, G*K): the block equals the full trailing dims, so every store
        # is a dense (TB, G*K) slab regardless of TB; reshaped to (B, G*K) below (contiguous).
        out_shape=jax.ShapeDtypeStruct((nsteps, TB, gk), jnp.float32),
        grid=(nsteps,),
        in_specs=[
            pl.BlockSpec((TB, S, D), lambda b: (b, 0, 0)),   # TB batch rows per step
            pl.BlockSpec((KD, gk), lambda b: (0, 0)),        # packed weights (constant index ->
            pl.BlockSpec((1, gk), lambda b: (0, 0)),         #  DMA'd once, re-used every step)
        ],
        out_specs=pl.BlockSpec((1, TB, gk), lambda b: (b, 0, 0)),
        compiler_params=pltpu.CompilerParams(
            # Parallel batch-block axis: shards grid steps across v7x's 2 TensorCores
            # (harmless on v5e/v6e).  _choose_block_batch keeps >= 2 steps when possible.
            dimension_semantics=("parallel",),
            # Headroom above the 16/32 MiB defaults while staying under v7x's 64 MiB physical VMEM.
            vmem_limit_bytes=48 * 1024 * 1024,
        ),
        cost_estimate=pl.CostEstimate(flops=flops, transcendentals=0,
                                      bytes_accessed=bytes_accessed),
    )(x_bsd, w_packed, bias_packed)
    return out.reshape(B, gk)


class CNNLayerPallas:
    """Pallas port of lightnlp CNNLayer (Conv2d(1,K,(ks,D)) x len(ks) + max-pool + concat)."""

    def __init__(self, input_dim, kernel_size=(3, 4, 5), kernel_num=200, *, key=None):
        self.input_dim = input_dim
        self.kernel_size = tuple(kernel_size)
        self.kernel_num = kernel_num
        self.output_dim = len(kernel_size) * kernel_num
        self.max_ks = max(self.kernel_size)
        if key is None:
            key = jax.random.PRNGKey(0)

        D, K = input_dim, kernel_num
        blocks, biases, raw = [], [], []
        for ks in self.kernel_size:
            key, kw, kb = jax.random.split(key, 3)
            bound = 1.0 / math.sqrt(ks * D)
            # PyTorch Conv2d weight shape: (K, 1, ks, D); deterministic synthetic init.
            w = jax.random.uniform(kw, (K, 1, ks, D), jnp.float32, -bound, bound)
            b = jax.random.uniform(kb, (K,), jnp.float32, -bound, bound)
            raw.append((w, b))
            # im2col block: row dt*D + d of W_g holds w[k, 0, dt, d]; rows dt >= ks stay zero.
            taps = jnp.transpose(w[:, 0, :, :], (1, 2, 0)).reshape(ks * D, K)   # (ks*D, K)
            wg = jnp.zeros((self.max_ks * D, K), jnp.float32).at[:ks * D, :].set(taps)
            blocks.append(wg)
            biases.append(b)

        self.raw_params = raw                                   # f32 originals (for the reference)
        # (max_ks*D, G*K) bf16: one im2col MXU sweep covers every kernel size.
        self.w_packed = jnp.concatenate(blocks, axis=1).astype(jnp.bfloat16)
        self.bias_packed = jnp.concatenate(biases)[None, :].astype(jnp.float32)  # (1, G*K)

    def __call__(self, x_nchw):
        # x: (B, 1, S, D) NCHW with C=1 -> (B, S, D).  Stays f32 on the wire; the kernel casts to
        # bf16 in-VMEM (avoids a separate XLA cast pass / extra HBM round-trip).
        B = x_nchw.shape[0]
        x = x_nchw[:, 0, :, :]
        out = fused_cnn_maxpool(x, self.w_packed, self.bias_packed,
                                self.kernel_size, self.kernel_num)     # (B, G*K)
        return out.reshape(B, self.output_dim, 1)                      # (B, G*K, 1) like torch


def _reference(layer, x_nchw):
    """Pure-JAX reference of the torch forward, built from the RAW per-kernel-size weights
    (catches packing bugs), with the same bf16 quantization of x / weights as the kernel."""
    x = x_nchw[:, 0, :, :].astype(jnp.float32)                          # (B, S, D)
    xq = x.astype(jnp.bfloat16).astype(jnp.float32)
    S = x.shape[1]
    outs = []
    for (w, b), ks in zip(layer.raw_params, layer.kernel_size):
        wq = w.astype(jnp.bfloat16).astype(jnp.float32)                 # (K, 1, ks, D)
        T = S - ks + 1
        score = jnp.zeros((x.shape[0], T, layer.kernel_num), jnp.float32)
        for dt in range(ks):
            score = score + jnp.einsum("btd,kd->btk", xq[:, dt:dt + T, :], wq[:, 0, dt, :])
        outs.append(jnp.max(score, axis=1) + b[None, :])                # max-pool then bias (exact)
    return jnp.concatenate(outs, axis=1)[:, :, None]                    # (B, G*K, 1)


if __name__ == "__main__":
    B, S, D = 16, 16, 32          # batch, sequence length, input_dim (small demo shapes)
    kernel_num = 128              # multiple of 128 -> lane-aligned column slices
    kernel_size = (3, 4, 5)

    key = jax.random.PRNGKey(0)
    kx, kp = jax.random.split(key)
    x = jax.random.normal(kx, (B, 1, S, D), jnp.float32)    # NCHW, C=1

    layer = CNNLayerPallas(D, kernel_size=kernel_size, kernel_num=kernel_num, key=kp)

    fwd = jax.jit(lambda xx: layer(xx))
    out = jax.block_until_ready(fwd(x))
    assert out.shape == (B, len(kernel_size) * kernel_num, 1), out.shape

    ref = _reference(layer, x)
    max_err = float(jnp.max(jnp.abs(out - ref)))
    assert jnp.allclose(out, ref, atol=1e-2, rtol=1e-2), max_err

    print("KERNEL_OK")
</pallas_src>

<mosaic_0001>
module attributes {stable_mosaic.version = 11 : i64} {
  func.func @_fused_cnn_kernel(%arg0: i32, %arg1: memref<8x16x32xf32, #tpu.memory_space<vmem>>, %arg2: memref<160x384xbf16, #tpu.memory_space<vmem>>, %arg3: memref<1x384xf32, #tpu.memory_space<vmem>>, %arg4: memref<1x8x384xf32, #tpu.memory_space<vmem>>) attributes {dimension_semantics = [#tpu.dimension_semantics<parallel>], iteration_bounds = array<i64: 2>, scalar_prefetch = 0 : i64, scratch_operands = 0 : i64, tpu.core_type = #tpu.core_type<tc>, window_params = [{transform_indices = @transform_0, window_bounds = array<i64: 8, 16, 32>}, {pipeline_mode = #tpu.pipeline_mode<synchronous>, transform_indices = @transform_1, window_bounds = array<i64: 160, 384>}, {pipeline_mode = #tpu.pipeline_mode<synchronous>, transform_indices = @transform_2, window_bounds = array<i64: 1, 384>}, {transform_indices = @transform_3, window_bounds = array<i64: 1, 8, 384>}]} {
    %c0 = arith.constant 0 : index
    %c0_0 = arith.constant 0 : index
    %c0_1 = arith.constant 0 : index
    %0 = vector.load %arg1[%c0, %c0_0, %c0_1] : memref<8x16x32xf32, #tpu.memory_space<vmem>>, vector<8x16x32xf32>
    %1 = vector.shape_cast %0 : vector<8x16x32xf32> to vector<128x32xf32>
    %c127_i32 = arith.constant 127 : i32
    %2 = tpu.dynamic_rotate %1 by %c127_i32 dim 0 : vector<128x32xf32>, i32 -> vector<128x32xf32>
    %c126_i32 = arith.constant 126 : i32
    %3 = tpu.dynamic_rotate %1 by %c126_i32 dim 0 : vector<128x32xf32>, i32 -> vector<128x32xf32>
    %c125_i32 = arith.constant 125 : i32
    %4 = tpu.dynamic_rotate %1 by %c125_i32 dim 0 : vector<128x32xf32>, i32 -> vector<128x32xf32>
    %c124_i32 = arith.constant 124 : i32
    %5 = tpu.dynamic_rotate %1 by %c124_i32 dim 0 : vector<128x32xf32>, i32 -> vector<128x32xf32>
    %6 = tpu.concatenate %1, %2, %3, %4, %5 in 1 : vector<128x32xf32>, vector<128x32xf32>, vector<128x32xf32>, vector<128x32xf32>, vector<128x32xf32> -> vector<128x160xf32>
    %7 = arith.truncf %6 : vector<128x160xf32> to vector<128x160xbf16>
    %c0_2 = arith.constant 0 : index
    %c0_3 = arith.constant 0 : index
    %8 = vector.load %arg2[%c0_2, %c0_3] : memref<160x384xbf16, #tpu.memory_space<vmem>>, vector<160x384xbf16>
    %cst = arith.constant dense<0.000000e+00> : vector<128x384xf32>
    %9 = tpu.matmul %7, %8, %cst {dimension_numbers = #tpu.dot_dimension_numbers<[1], [0], [0], [1], [0, 0, 1, 1], [], []>} : vector<128x160xbf16>, vector<160x384xbf16>, vector<128x384xf32> -> vector<128x384xf32>
    %10 = vector.shape_cast %9 : vector<128x384xf32> to vector<8x16x384xf32>
    %11 = tpu.iota {dimensions = array<i32: 1>} : vector<8x16x1xi32>
    %12 = vector.extract_strided_slice %10 {offsets = [0, 0, 0], sizes = [8, 16, 128], strides = [1, 1, 1]} : vector<8x16x384xf32> to vector<8x16x128xf32>
    %c13_i32 = arith.constant 13 : i32
    %13 = vector.broadcast %c13_i32 : i32 to vector<8x16x1xi32>
    %14 = arith.cmpi sle, %11, %13 : vector<8x16x1xi32>
    %cst_4 = arith.constant 0xFF800000 : f32
    %15 = vector.shape_cast %14 : vector<8x16x1xi1> to vector<8x16x1xi1>
    %16 = vector.broadcast %15 : vector<8x16x1xi1> to vector<8x16x128xi1>
    %17 = vector.broadcast %cst_4 : f32 to vector<8x16x128xf32>
    %18 = arith.select %16, %12, %17 : vector<8x16x128xi1>, vector<8x16x128xf32>
    %cst_5 = arith.constant dense<0xFF800000> : vector<8x128xf32>
    %19 = vector.multi_reduction <maximumf>, %18, %cst_5 [1] : vector<8x16x128xf32> to vector<8x128xf32>
    %20 = vector.extract_strided_slice %10 {offsets = [0, 0, 128], sizes = [8, 16, 128], strides = [1, 1, 1]} : vector<8x16x384xf32> to vector<8x16x128xf32>
    %c12_i32 = arith.constant 12 : i32
    %21 = vector.broadcast %c12_i32 : i32 to vector<8x16x1xi32>
    %22 = arith.cmpi sle, %11, %21 : vector<8x16x1xi32>
    %cst_6 = arith.constant 0xFF800000 : f32
    %23 = vector.shape_cast %22 : vector<8x16x1xi1> to vector<8x16x1xi1>
    %24 = vector.broadcast %23 : vector<8x16x1xi1> to vector<8x16x128xi1>
    %25 = vector.broadcast %cst_6 : f32 to vector<8x16x128xf32>
    %26 = arith.select %24, %20, %25 : vector<8x16x128xi1>, vector<8x16x128xf32>
    %cst_7 = arith.constant dense<0xFF800000> : vector<8x128xf32>
    %27 = vector.multi_reduction <maximumf>, %26, %cst_7 [1] : vector<8x16x128xf32> to vector<8x128xf32>
    %28 = vector.extract_strided_slice %10 {offsets = [0, 0, 256], sizes = [8, 16, 128], strides = [1, 1, 1]} : vector<8x16x384xf32> to vector<8x16x128xf32>
    %c11_i32 = arith.constant 11 : i32
    %29 = vector.broadcast %c11_i32 : i32 to vector<8x16x1xi32>
    %30 = arith.cmpi sle, %11, %29 : vector<8x16x1xi32>
    %cst_8 = arith.constant 0xFF800000 : f32
    %31 = vector.shape_cast %30 : vector<8x16x1xi1> to vector<8x16x1xi1>
    %32 = vector.broadcast %31 : vector<8x16x1xi1> to vector<8x16x128xi1>
    %33 = vector.broadcast %cst_8 : f32 to vector<8x16x128xf32>
    %34 = arith.select %32, %28, %33 : vector<8x16x128xi1>, vector<8x16x128xf32>
    %cst_9 = arith.constant dense<0xFF800000> : vector<8x128xf32>
    %35 = vector.multi_reduction <maximumf>, %34, %cst_9 [1] : vector<8x16x128xf32> to vector<8x128xf32>
    %36 = tpu.concatenate %19, %27, %35 in 1 : vector<8x128xf32>, vector<8x128xf32>, vector<8x128xf32> -> vector<8x384xf32>
    %c0_10 = arith.constant 0 : index
    %c0_11 = arith.constant 0 : index
    %37 = vector.load %arg3[%c0_10, %c0_11] : memref<1x384xf32, #tpu.memory_space<vmem>>, vector<1x384xf32>
    %38 = vector.broadcast %37 : vector<1x384xf32> to vector<8x384xf32>
    %39 = arith.addf %36, %38 : vector<8x384xf32>
    %c0_12 = arith.constant 0 : index
    %c0_13 = arith.constant 0 : index
    %c0_14 = arith.constant 0 : index
    %40 = vector.load %arg4[%c0_12, %c0_13, %c0_14] : memref<1x8x384xf32, #tpu.memory_space<vmem>>, vector<1x8x384xf32>
    %41 = vector.shape_cast %40 : vector<1x8x384xf32> to vector<8x384xf32>
    %42 = vector.shape_cast %39 : vector<8x384xf32> to vector<1x8x384xf32>
    tpu.vector_store %arg4[%c0_12, %c0_13, %c0_14], %42 {strides = array<i32>} : memref<1x8x384xf32, #tpu.memory_space<vmem>>, vector<1x8x384xf32>,
    return
  }
  func.func @transform_0(%arg0: i32) -> (i32, i32, i32) {
    %c0_i32 = arith.constant 0 : i32
    %c0_i32_0 = arith.constant 0 : i32
    %c0_i32_1 = arith.constant 0 : i32
    return %arg0, %c0_i32, %c0_i32_0 : i32, i32, i32
  }
  func.func @transform_1(%arg0: i32) -> (i32, i32) {
    %c0_i32 = arith.constant 0 : i32
    %c0_i32_0 = arith.constant 0 : i32
    %c0_i32_1 = arith.constant 0 : i32
    return %c0_i32, %c0_i32_0 : i32, i32
  }
  func.func @transform_2(%arg0: i32) -> (i32, i32) {
    %c0_i32 = arith.constant 0 : i32
    %c0_i32_0 = arith.constant 0 : i32
    %c0_i32_1 = arith.constant 0 : i32
    return %c0_i32, %c0_i32_0 : i32, i32
  }
  func.func @transform_3(%arg0: i32) -> (i32, i32, i32) {
    %c0_i32 = arith.constant 0 : i32
    %c0_i32_0 = arith.constant 0 : i32
    %c0_i32_1 = arith.constant 0 : i32
    return %arg0, %c0_i32, %c0_i32_0 : i32, i32, i32
  }
}

</mosaic_0001>

<llo_original>
// kernel: _lambda_.1
$region0: #{_lambda_.1}
  #allocation0 [shape = 'u32[]', space=smem, size = 0x4, offset = 0x4, fixed_abs, tag = 'smem constant byte address 0x4 - core index']
  #allocation1 [shape = 'u32[72,128]{1,0:T(1,128)}', space=vmem, size = 0x9000, scoped, tag = 'internal scratch']
  %s0 = inlined_call_operand.hbm [shape: f32[16,16,32], index: 0, kind: input, shape index: {}]
  %s1 = inlined_call_operand.hbm [shape: bf16[160,384], index: 1, kind: input, shape index: {}]
  %s2 = inlined_call_operand.hbm [shape: f32[1,384], index: 2, kind: input, shape index: {}]
  %s3 = inlined_call_operand.vmem [shape: f32[2,8,384], index: 3, kind: output, shape index: {}]
  %s4 = sld [smem:[#allocation0]]
  $region57: #{_lambda_.1} parent=0
    _
  %s6 = ssub.s32 1, %s4
  %s7 = scalar_select 0, %s6, %s4
  $region1: #{_lambda_.1} parent=0
    #allocation2 [shape = 'u8[131072]{0}', space=vmem, size = 0x20000, scoped, tag = 'input window, operand 0']
    #allocation3 [shape = 's32[2]{0}', space=sflag, size = 0x8, scoped, tag = 'scoped memory for _lambda_.1']
    #allocation4 [shape = 'u8[122880]{0}', space=vmem, size = 0x1e000, scoped, tag = 'input window, operand 1, single buffered']
    #allocation5 [shape = 's32[1]{0}', space=sflag, size = 0x4, scoped, tag = 'scoped memory for _lambda_.1']
    #allocation6 [shape = 'u8[1536]{0}', space=vmem, size = 0x800, scoped, tag = 'input window, operand 2, single buffered']
    %8 = vsyncpa [#allocation3], 0
    %s9 = scalar_lea.sflag [#allocation3], 1
    %10 = vsyncpa %s9, 0
    %11 = vsyncpa [#allocation5], 0
    loop: start=0, step=1, limit=4
    $region2: #{_lambda_.1} parent=1 // loop_pre_header
      _
    $region3: #{_lambda_.1} parent=1 // loop_header
      %s13 = sphi 0, %s17
      %p14 = scmp.ge.s32.totalorder %s13, 4
      %s23 = sphi 0, %s25
      %s26 = sphi 0, %s23
      %s27 = sphi 0, %s26
      %s43 = sphi 0, %s27
      %s47 = sphi 0, %s47
      %s49 = sphi 0, %s47
      %s50 = sphi 0, %s49
      %s64 = sphi 0, %s50
      %s68 = sphi 0, %s68
      %s70 = sphi 0, %s68
      %s71 = sphi 0, %s70
      %s85 = sphi 0, %s71
      %s91 = sphi 0, %s93
      %s94 = sphi 0, %s91
      %s95 = sphi 0, %s94
      %s111 = sphi 0, %s95
    $region4: #{_lambda_.1} parent=1 // loop_header_branch
      %16 = sbr.rel (%p14) target = $region8
    $region5: #{_lambda_.1} parent=1 // loop_body
      %s18 = ssub.s32 %s13, 1
      %s19 = ssub.s32 %s13, 2
      %s20 = sadd.s32 %s13, 1
      %s21 = ssub.s32 %s13, %s20
      %p22 = scmp.eq.s32.totalorder %s21, 0
      %s24 = sadd.s32 %s23, 1
      %s25 = scalar_select %p22, %s23, %s24
      %p28 = pneg %p22
      %p29 = scmp.eq.s32.totalorder %s13, 1
      %p30 = por %p28, %p29
      %p31 = scmp.ne.s32.totalorder %s23, %s26
      %p32 = scmp.eq.s32.totalorder %s13, 0
      %p33 = por %p31, %p32
      %p34 = scmp.ne.s32.totalorder %s23, %s26
      %p35 = scmp.eq.s32.totalorder %s18, 1
      %p36 = por %p34, %p35
      %p37 = scmp.ne.s32.totalorder %s26, %s27
      %p38 = scmp.eq.s32.totalorder %s18, 0
      %p39 = por %p37, %p38
      %p40 = scmp.ne.s32.totalorder %s26, %s27
      %p41 = scmp.eq.s32.totalorder %s19, 1
      %p42 = por %p40, %p41
      %p44 = scmp.ne.s32.totalorder %s27, %s43
      %p45 = scmp.eq.s32.totalorder %s19, 0
      %p46 = por %p44, %p45
      %s48 = sadd.s32 %s47, 1
      %p51 = scmp.eq.s32.totalorder %s13, 1
      %p52 = scmp.ne.s32.totalorder %s47, %s49
      %p53 = scmp.eq.s32.totalorder %s13, 0
      %p54 = por %p52, %p53
      %p55 = scmp.ne.s32.totalorder %s47, %s49
      %p56 = scmp.eq.s32.totalorder %s18, 1
      %p57 = por %p55, %p56
      %p58 = scmp.ne.s32.totalorder %s49, %s50
      %p59 = scmp.eq.s32.totalorder %s18, 0
      %p60 = por %p58, %p59
      %p61 = scmp.ne.s32.totalorder %s49, %s50
      %p62 = scmp.eq.s32.totalorder %s19, 1
      %p63 = por %p61, %p62
      %p65 = scmp.ne.s32.totalorder %s50, %s64
      %p66 = scmp.eq.s32.totalorder %s19, 0
      %p67 = por %p65, %p66
      %s69 = sadd.s32 %s68, 1
      %p72 = scmp.eq.s32.totalorder %s13, 1
      %p73 = scmp.ne.s32.totalorder %s68, %s70
      %p74 = scmp.eq.s32.totalorder %s13, 0
      %p75 = por %p73, %p74
      %p76 = scmp.ne.s32.totalorder %s68, %s70
      %p77 = scmp.eq.s32.totalorder %s18, 1
      %p78 = por %p76, %p77
      %p79 = scmp.ne.s32.totalorder %s70, %s71
      %p80 = scmp.eq.s32.totalorder %s18, 0
      %p81 = por %p79, %p80
      %p82 = scmp.ne.s32.totalorder %s70, %s71
      %p83 = scmp.eq.s32.totalorder %s19, 1
      %p84 = por %p82, %p83
      %p86 = scmp.ne.s32.totalorder %s71, %s85
      %p87 = scmp.eq.s32.totalorder %s19, 0
      %p88 = por %p86, %p87
      %s89 = ssub.s32 %s13, %s20
      %p90 = scmp.eq.s32.totalorder %s89, 0
      %s92 = sadd.s32 %s91, 1
      %s93 = scalar_select %p90, %s91, %s92
      %p96 = pneg %p90
      %p97 = scmp.eq.s32.totalorder %s13, 1
      %p98 = por %p96, %p97
      %p99 = scmp.ne.s32.totalorder %s91, %s94
      %p100 = scmp.eq.s32.totalorder %s13, 0
      %p101 = por %p99, %p100
      %p102 = scmp.ne.s32.totalorder %s91, %s94
      %p103 = scmp.eq.s32.totalorder %s18, 1
      %p104 = por %p102, %p103
      %p105 = scmp.ne.s32.totalorder %s94, %s95
      %p106 = scmp.eq.s32.totalorder %s18, 0
      %p107 = por %p105, %p106
      %p108 = scmp.ne.s32.totalorder %s94, %s95
      %p109 = scmp.eq.s32.totalorder %s19, 1
      %p110 = por %p108, %p109
      %p112 = scmp.ne.s32.totalorder %s95, %s111
      %p113 = scmp.eq.s32.totalorder %s19, 0
      %p114 = por %p112, %p113
      %p115 = scmp.le.s32.totalorder 1, %s13
      %p116 = scmp.lt.s32.totalorder %s13, 3
      %p117 = pnand %p115, %p116
      %p118 = pneg %p117
      // Predicated region
      $region9: #{_lambda_.1} parent=5 // pred_check
        _
      $region10: #{_lambda_.1} parent=5 // pred_check_branch
        %120 = sbr.rel (%p117) target = $region12
      $region11: #{_lambda_.1} parent=5 // pred_region
        %s121 = ssub.s32 %s13, 1
        // Predicated region
        $region13: #{_lambda_.1} parent=11 // pred_check
          %p122 = pneg %p60
        $region14: #{_lambda_.1} parent=11 // pred_check_branch
          %124 = sbr.rel (%p122) target = $region16
        $region15: #{_lambda_.1} parent=11 // pred_region
          %126 = vsyncadd [#allocation5], 0
          %s127 = sshll.u32 %s1, 4
          %s128 = int_to_ptr.hbm [resolvable:$true] %s127
          %s129 = sshll.u32 [#allocation4], 4
          %s130 = int_to_ptr.vmem [resolvable:$true] %s129
          %135 = dma.hbm_to_vmem [thread:$0]  %s128, 3840, %s130, [#allocation5], 192, 192, 12
        $region16: #{_lambda_.1} parent=11 // pred_fallthru
          _
        // Predicated region
        $region17: #{_lambda_.1} parent=11 // pred_check
          %p136 = pneg %p81
        $region18: #{_lambda_.1} parent=11 // pred_check_branch
          %138 = sbr.rel (%p136) target = $region20
        $region19: #{_lambda_.1} parent=11 // pred_region
          %140 = vsyncadd [#allocation5], 0
          %s142 = sshll.u32 %s2, 4
          %s143 = int_to_ptr.hbm [resolvable:$true] %s142
          %s144 = sshll.u32 [#allocation6], 4
          %s145 = int_to_ptr.vmem [resolvable:$true] %s144
          %147 = dma.hbm_to_vmem [thread:$0]  %s143, 48, %s145, [#allocation5]
        $region20: #{_lambda_.1} parent=11 // pred_fallthru
          _
      $region12: #{_lambda_.1} parent=5 // pred_fallthru
        _
      %p148 = scmp.lt.s32.totalorder %s13, 2
      // Predicated region
      $region21: #{_lambda_.1} parent=5 // pred_check
        %p149 = pneg %p148
      $region22: #{_lambda_.1} parent=5 // pred_check_branch
        %151 = sbr.rel (%p149) target = $region24
      $region23: #{_lambda_.1} parent=5 // pred_region
        // Predicated region
        $region25: #{_lambda_.1} parent=23 // pred_check
          %p152 = pneg %p33
        $region26: #{_lambda_.1} parent=23 // pred_check_branch
          %154 = sbr.rel (%p152) target = $region28
        $region27: #{_lambda_.1} parent=23 // pred_region
          %s155 = sand.u32 %s23, 1
          %s156 = scalar_lea.sflag [#allocation3], %s155
          %s157 = sand.u32 %s23, 1
          %s158 = smul.addr %s157, 128
          %s159 = scalar_lea.vmem [#allocation2], %s158
          %s160 = smul.u32 8, %s13
          %162 = vsyncadd %s156, 0
          %s163 = smul.addr %s160, 2
          %s164 = smul.addr %s163, 8
          %s165 = scalar_lea.hbm %s0, %s164
          %s166 = sshll.u32 %s165, 4
          %s167 = int_to_ptr.hbm [resolvable:$true] %s166
          %s168 = sshll.u32 %s159, 4
          %s169 = int_to_ptr.vmem [resolvable:$true] %s168
          %174 = dma.hbm_to_vmem [thread:$0]  %s167, 2048, %s169, %s156, 128, 128, 8
        $region28: #{_lambda_.1} parent=23 // pred_fallthru
          _
      $region24: #{_lambda_.1} parent=5 // pred_fallthru
        _
      %p175 = scmp.le.s32.totalorder 1, %s13
      %p176 = scmp.lt.s32.totalorder %s13, 3
      %p177 = pnand %p175, %p176
      %p178 = pneg %p177
      // Predicated region
      $region29: #{_lambda_.1} parent=5 // pred_check
        _
      $region30: #{_lambda_.1} parent=5 // pred_check_branch
        %180 = sbr.rel (%p177) target = $region32
      $region31: #{_lambda_.1} parent=5 // pred_region
        %s181 = ssub.s32 %s13, 1
        %s182 = sand.u32 %s26, 1
        %s183 = scalar_lea.sflag [#allocation3], %s182
        %s184 = sand.u32 %s26, 1
        %s185 = smul.addr %s184, 128
        %s186 = scalar_lea.vmem [#allocation2], %s185
        // Predicated region
        $region33: #{_lambda_.1} parent=31 // pred_check
          %p187 = pneg %p39
        $region34: #{_lambda_.1} parent=31 // pred_check_branch
          %189 = sbr.rel (%p187) target = $region36
        $region35: #{_lambda_.1} parent=31 // pred_region
          %191 = dma.done %s183, 2048
        $region36: #{_lambda_.1} parent=31 // pred_fallthru
          _
        // Predicated region
        $region37: #{_lambda_.1} parent=31 // pred_check
          %p192 = pneg %p60
        $region38: #{_lambda_.1} parent=31 // pred_check_branch
          %194 = sbr.rel (%p192) target = $region40
        $region39: #{_lambda_.1} parent=31 // pred_region
          %196 = dma.done [#allocation5], 3840
        $region40: #{_lambda_.1} parent=31 // pred_fallthru
          _
        // Predicated region
        $region41: #{_lambda_.1} parent=31 // pred_check
          %p197 = pneg %p81
        $region42: #{_lambda_.1} parent=31 // pred_check_branch
          %199 = sbr.rel (%p197) target = $region44
        $region43: #{_lambda_.1} parent=31 // pred_region
          %201 = dma.done [#allocation5], 48
        $region44: #{_lambda_.1} parent=31 // pred_fallthru
          _
        %s202 = sand.u32 %s26, 1
        %s203 = scalar_lea.sflag [#allocation3], %s202
        %s204 = sand.u32 %s26, 1
        %s205 = smul.addr %s204, 128
        %s206 = scalar_lea.vmem [#allocation2], %s205
        %p207 = pneg %p39
        %p208 = pneg %p36
        %p209 = pneg %p60
        %p210 = pneg %p57
        %p211 = pneg %p81
        %p212 = pneg %p78
        %p213 = pneg %p107
        %p214 = pneg %p104
        %p215 = scmp.lt.s32.totalorder %s18, 1
        %s216 = scalar_select %p215, %s18, 1
        %s217 = smul.addr %s216, 3
        %s218 = smul.addr %s217, 8
        %s219 = scalar_lea.vmem %s3, %s218
        %s220 = smul.u32 8, %s18
        %p221 = scmp.lt.s32.totalorder %s18, 1
        %s222 = scalar_select %p221, %s18, 1
        %s223 = smul.addr %s222, 3
        %s224 = smul.addr %s223, 8
        %s225 = scalar_lea.vmem %s3, %s224
        %v227 = vld [vmem:[%s186] sm:$0xff]
        %v228 = vld [vmem:[%s186 + $0x8] sm:$0xff]
        %v229 = vld [vmem:[%s186 + $0x10] sm:$0xff]
        %v230 = vld [vmem:[%s186 + $0x18] sm:$0xff]
        %v231 = vld [vmem:[%s186 + $0x20] sm:$0xff]
        %v232 = vld [vmem:[%s186 + $0x28] sm:$0xff]
        %v233 = vld [vmem:[%s186 + $0x30] sm:$0xff]
        %v234 = vld [vmem:[%s186 + $0x38] sm:$0xff]
        %v235 = vld [vmem:[%s186 + $0x40] sm:$0xff]
        %v236 = vld [vmem:[%s186 + $0x48] sm:$0xff]
        %v237 = vld [vmem:[%s186 + $0x50] sm:$0xff]
        %v238 = vld [vmem:[%s186 + $0x58] sm:$0xff]
        %v239 = vld [vmem:[%s186 + $0x60] sm:$0xff]
        %v240 = vld [vmem:[%s186 + $0x68] sm:$0xff]
        %v241 = vld [vmem:[%s186 + $0x70] sm:$0xff]
        %v242 = vld [vmem:[%s186 + $0x78] sm:$0xff]
        %v243 = vrot.slane %v227, 1
        %v244 = vrot.slane %v228, 1
        %v245 = vrot.slane %v229, 1
        %v246 = vrot.slane %v230, 1
        %v247 = vrot.slane %v231, 1
        %v248 = vrot.slane %v232, 1
        %v249 = vrot.slane %v233, 1
        %v250 = vrot.slane %v234, 1
        %v251 = vrot.slane %v235, 1
        %v252 = vrot.slane %v236, 1
        %v253 = vrot.slane %v237, 1
        %v254 = vrot.slane %v238, 1
        %v255 = vrot.slane %v239, 1
        %v256 = vrot.slane %v240, 1
        %v257 = vrot.slane %v241, 1
        %v258 = vrot.slane %v242, 1
        %v259 = vlaneseq
        %v260 = vshrl.u32 %v259, 7
        %vm261 = vcmp.lt.s32.totalorder %v260, 7
        %v262 = vsel %vm261, %v257, %v258
        %v263 = vsel %vm261, %v256, %v257
        %v264 = vsel %vm261, %v255, %v256
        %v265 = vsel %vm261, %v254, %v255
        %v266 = vsel %vm261, %v253, %v254
        %v267 = vsel %vm261, %v252, %v253
        %v268 = vsel %vm261, %v251, %v252
        %v269 = vsel %vm261, %v250, %v251
        %v270 = vsel %vm261, %v249, %v250
        %v271 = vsel %vm261, %v248, %v249
        %v272 = vsel %vm261, %v247, %v248
        %v273 = vsel %vm261, %v246, %v247
        %v274 = vsel %vm261, %v245, %v246
        %v275 = vsel %vm261, %v244, %v245
        %v276 = vsel %vm261, %v243, %v244
        %v277 = vsel %vm261, %v258, %v243
        %v278 = vrot.slane %v227, 2
        %v279 = vrot.slane %v228, 2
        %v280 = vrot.slane %v229, 2
        %v281 = vrot.slane %v230, 2
        %v282 = vrot.slane %v231, 2
        %v283 = vrot.slane %v232, 2
        %v284 = vrot.slane %v233, 2
        %v285 = vrot.slane %v234, 2
        %v286 = vrot.slane %v235, 2
        %v287 = vrot.slane %v236, 2
        %v288 = vrot.slane %v237, 2
        %v289 = vrot.slane %v238, 2
        %v290 = vrot.slane %v239, 2
        %v291 = vrot.slane %v240, 2
        %v292 = vrot.slane %v241, 2
        %v293 = vrot.slane %v242, 2
        %vm294 = vcmp.lt.s32.totalorder %v260, 6
        %v295 = vsel %vm294, %v292, %v293
        %v296 = vsel %vm294, %v291, %v292
        %v297 = vsel %vm294, %v290, %v291
        %v298 = vsel %vm294, %v289, %v290
        %v299 = vsel %vm294, %v288, %v289
        %v300 = vsel %vm294, %v287, %v288
        %v301 = vsel %vm294, %v286, %v287
        %v302 = vsel %vm294, %v285, %v286
        %v303 = vsel %vm294, %v284, %v285
        %v304 = vsel %vm294, %v283, %v284
        %v305 = vsel %vm294, %v282, %v283
        %v306 = vsel %vm294, %v281, %v282
        %v307 = vsel %vm294, %v280, %v281
        %v308 = vsel %vm294, %v279, %v280
        %v309 = vsel %vm294, %v278, %v279
        %v310 = vsel %vm294, %v293, %v278
        %v311 = vrot.slane %v227, 3
        %v312 = vrot.slane %v228, 3
        %v313 = vrot.slane %v229, 3
        %v314 = vrot.slane %v230, 3
        %v315 = vrot.slane %v231, 3
        %v316 = vrot.slane %v232, 3
        %v317 = vrot.slane %v233, 3
        %v318 = vrot.slane %v234, 3
        %v319 = vrot.slane %v235, 3
        %v320 = vrot.slane %v236, 3
        %v321 = vrot.slane %v237, 3
        %v322 = vrot.slane %v238, 3
        %v323 = vrot.slane %v239, 3
        %v324 = vrot.slane %v240, 3
        %v325 = vrot.slane %v241, 3
        %v326 = vrot.slane %v242, 3
        %vm327 = vcmp.lt.s32.totalorder %v260, 5
        %v328 = vsel %vm327, %v325, %v326
        %v329 = vsel %vm327, %v324, %v325
        %v330 = vsel %vm327, %v323, %v324
        %v331 = vsel %vm327, %v322, %v323
        %v332 = vsel %vm327, %v321, %v322
        %v333 = vsel %vm327, %v320, %v321
        %v334 = vsel %vm327, %v319, %v320
        %v335 = vsel %vm327, %v318, %v319
        %v336 = vsel %vm327, %v317, %v318
        %v337 = vsel %vm327, %v316, %v317
        %v338 = vsel %vm327, %v315, %v316
        %v339 = vsel %vm327, %v314, %v315
        %v340 = vsel %vm327, %v313, %v314
        %v341 = vsel %vm327, %v312, %v313
        %v342 = vsel %vm327, %v311, %v312
        %v343 = vsel %vm327, %v326, %v311
        %v344 = vrot.slane %v227, 4
        %v345 = vrot.slane %v228, 4
        %v346 = vrot.slane %v229, 4
        %v347 = vrot.slane %v230, 4
        %v348 = vrot.slane %v231, 4
        %v349 = vrot.slane %v232, 4
        %v350 = vrot.slane %v233, 4
        %v351 = vrot.slane %v234, 4
        %v352 = vrot.slane %v235, 4
        %v353 = vrot.slane %v236, 4
        %v354 = vrot.slane %v237, 4
        %v355 = vrot.slane %v238, 4
        %v356 = vrot.slane %v239, 4
        %v357 = vrot.slane %v240, 4
        %v358 = vrot.slane %v241, 4
        %v359 = vrot.slane %v242, 4
        %vm360 = vcmp.lt.s32.totalorder %v260, 4
        %v361 = vsel %vm360, %v358, %v359
        %v362 = vsel %vm360, %v357, %v358
        %v363 = vsel %vm360, %v356, %v357
        %v364 = vsel %vm360, %v355, %v356
        %v365 = vsel %vm360, %v354, %v355
        %v366 = vsel %vm360, %v353, %v354
        %v367 = vsel %vm360, %v352, %v353
        %v368 = vsel %vm360, %v351, %v352
        %v369 = vsel %vm360, %v350, %v351
        %v370 = vsel %vm360, %v349, %v350
        %v371 = vsel %vm360, %v348, %v349
        %v372 = vsel %vm360, %v347, %v348
        %v373 = vsel %vm360, %v346, %v347
        %v374 = vsel %vm360, %v345, %v346
        %v375 = vsel %vm360, %v344, %v345
        %v376 = vsel %vm360, %v359, %v344
        %393 = vrot.lane.b32.xlu0 %v276, 32
        %v394 = vpop.permute.xlu0 %393
        %395 = vrot.lane.b32.xlu0 %v275, 32
        %v396 = vpop.permute.xlu0 %395
        %397 = vrot.lane.b32.xlu0 %v274, 32
        %v398 = vpop.permute.xlu0 %397
        %399 = vrot.lane.b32.xlu0 %v273, 32
        %v400 = vpop.permute.xlu0 %399
        %401 = vrot.lane.b32.xlu0 %v272, 32
        %v402 = vpop.permute.xlu0 %401
        %403 = vrot.lane.b32.xlu0 %v271, 32
        %v404 = vpop.permute.xlu0 %403
        %405 = vrot.lane.b32.xlu0 %v270, 32
        %v406 = vpop.permute.xlu0 %405
        %407 = vrot.lane.b32.xlu0 %v269, 32
        %v408 = vpop.permute.xlu0 %407
        %409 = vrot.lane.b32.xlu0 %v268, 32
        %v410 = vpop.permute.xlu0 %409
        %411 = vrot.lane.b32.xlu0 %v267, 32
        %v412 = vpop.permute.xlu0 %411
        %413 = vrot.lane.b32.xlu0 %v266, 32
        %v414 = vpop.permute.xlu0 %413
        %415 = vrot.lane.b32.xlu0 %v265, 32
        %v416 = vpop.permute.xlu0 %415
        %417 = vrot.lane.b32.xlu0 %v264, 32
        %v418 = vpop.permute.xlu0 %417
        %419 = vrot.lane.b32.xlu0 %v263, 32
        %v420 = vpop.permute.xlu0 %419
        %421 = vrot.lane.b32.xlu0 %v262, 32
        %v422 = vpop.permute.xlu0 %421
        %423 = vrot.lane.b32.xlu0 %v277, 32
        %v424 = vpop.permute.xlu0 %423
        %457 = vrot.lane.b32.xlu0 %v309, 64
        %v458 = vpop.permute.xlu0 %457
        %459 = vrot.lane.b32.xlu0 %v308, 64
        %v460 = vpop.permute.xlu0 %459
        %461 = vrot.lane.b32.xlu0 %v307, 64
        %v462 = vpop.permute.xlu0 %461
        %463 = vrot.lane.b32.xlu0 %v306, 64
        %v464 = vpop.permute.xlu0 %463
        %465 = vrot.lane.b32.xlu0 %v305, 64
        %v466 = vpop.permute.xlu0 %465
        %467 = vrot.lane.b32.xlu0 %v304, 64
        %v468 = vpop.permute.xlu0 %467
        %469 = vrot.lane.b32.xlu0 %v303, 64
        %v470 = vpop.permute.xlu0 %469
        %471 = vrot.lane.b32.xlu0 %v302, 64
        %v472 = vpop.permute.xlu0 %471
        %473 = vrot.lane.b32.xlu0 %v301, 64
        %v474 = vpop.permute.xlu0 %473
        %475 = vrot.lane.b32.xlu0 %v300, 64
        %v476 = vpop.permute.xlu0 %475
        %477 = vrot.lane.b32.xlu0 %v299, 64
        %v478 = vpop.permute.xlu0 %477
        %479 = vrot.lane.b32.xlu0 %v298, 64
        %v480 = vpop.permute.xlu0 %479
        %481 = vrot.lane.b32.xlu0 %v297, 64
        %v482 = vpop.permute.xlu0 %481
        %483 = vrot.lane.b32.xlu0 %v296, 64
        %v484 = vpop.permute.xlu0 %483
        %485 = vrot.lane.b32.xlu0 %v295, 64
        %v486 = vpop.permute.xlu0 %485
        %487 = vrot.lane.b32.xlu0 %v310, 64
        %v488 = vpop.permute.xlu0 %487
        %521 = vrot.lane.b32.xlu0 %v342, 96
        %v522 = vpop.permute.xlu0 %521
        %523 = vrot.lane.b32.xlu0 %v341, 96
        %v524 = vpop.permute.xlu0 %523
        %525 = vrot.lane.b32.xlu0 %v340, 96
        %v526 = vpop.permute.xlu0 %525
        %527 = vrot.lane.b32.xlu0 %v339, 96
        %v528 = vpop.permute.xlu0 %527
        %529 = vrot.lane.b32.xlu0 %v338, 96
        %v530 = vpop.permute.xlu0 %529
        %531 = vrot.lane.b32.xlu0 %v337, 96
        %v532 = vpop.permute.xlu0 %531
        %533 = vrot.lane.b32.xlu0 %v336, 96
        %v534 = vpop.permute.xlu0 %533
        %535 = vrot.lane.b32.xlu0 %v335, 96
        %v536 = vpop.permute.xlu0 %535
        %537 = vrot.lane.b32.xlu0 %v334, 96
        %v538 = vpop.permute.xlu0 %537
        %539 = vrot.lane.b32.xlu0 %v333, 96
        %v540 = vpop.permute.xlu0 %539
        %541 = vrot.lane.b32.xlu0 %v332, 96
        %v542 = vpop.permute.xlu0 %541
        %543 = vrot.lane.b32.xlu0 %v331, 96
        %v544 = vpop.permute.xlu0 %543
        %545 = vrot.lane.b32.xlu0 %v330, 96
        %v546 = vpop.permute.xlu0 %545
        %547 = vrot.lane.b32.xlu0 %v329, 96
        %v548 = vpop.permute.xlu0 %547
        %549 = vrot.lane.b32.xlu0 %v328, 96
        %v550 = vpop.permute.xlu0 %549
        %551 = vrot.lane.b32.xlu0 %v343, 96
        %v552 = vpop.permute.xlu0 %551
        %vm569 = vcmask 261120
        %v570 = vsel %vm569, %v227, %v394
        %v571 = vsel %vm569, %v228, %v396
        %v572 = vsel %vm569, %v229, %v398
        %v573 = vsel %vm569, %v230, %v400
        %v574 = vsel %vm569, %v231, %v402
        %v575 = vsel %vm569, %v232, %v404
        %v576 = vsel %vm569, %v233, %v406
        %v577 = vsel %vm569, %v234, %v408
        %v578 = vsel %vm569, %v235, %v410
        %v579 = vsel %vm569, %v236, %v412
        %v580 = vsel %vm569, %v237, %v414
        %v581 = vsel %vm569, %v238, %v416
        %v582 = vsel %vm569, %v239, %v418
        %v583 = vsel %vm569, %v240, %v420
        %v584 = vsel %vm569, %v241, %v422
        %v585 = vsel %vm569, %v242, %v424
        %vm586 = vcmask 523264
        %v587 = vsel %vm586, %v570, %v458
        %v588 = vsel %vm586, %v571, %v460
        %v589 = vsel %vm586, %v572, %v462
        %v590 = vsel %vm586, %v573, %v464
        %v591 = vsel %vm586, %v574, %v466
        %v592 = vsel %vm586, %v575, %v468
        %v593 = vsel %vm586, %v576, %v470
        %v594 = vsel %vm586, %v577, %v472
        %v595 = vsel %vm586, %v578, %v474
        %v596 = vsel %vm586, %v579, %v476
        %v597 = vsel %vm586, %v580, %v478
        %v598 = vsel %vm586, %v581, %v480
        %v599 = vsel %vm586, %v582, %v482
        %v600 = vsel %vm586, %v583, %v484
        %v601 = vsel %vm586, %v584, %v486
        %v602 = vsel %vm586, %v585, %v488
        %vm603 = vcmask 785408
        %v604 = vsel %vm603, %v587, %v522
        %v605 = vsel %vm603, %v588, %v524
        %v606 = vsel %vm603, %v589, %v526
        %v607 = vsel %vm603, %v590, %v528
        %v608 = vsel %vm603, %v591, %v530
        %v609 = vsel %vm603, %v592, %v532
        %v610 = vsel %vm603, %v593, %v534
        %v611 = vsel %vm603, %v594, %v536
        %v612 = vsel %vm603, %v595, %v538
        %v613 = vsel %vm603, %v596, %v540
        %v614 = vsel %vm603, %v597, %v542
        %v615 = vsel %vm603, %v598, %v544
        %v616 = vsel %vm603, %v599, %v546
        %v617 = vsel %vm603, %v600, %v548
        %v618 = vsel %vm603, %v601, %v550
        %v619 = vsel %vm603, %v602, %v552
        %v620 = vpack.c.bf16 %v605, %v604
        %v621 = vpack.c.bf16 %v374, %v375
        %v622 = vpack.c.bf16 %v607, %v606
        %v623 = vpack.c.bf16 %v372, %v373
        %v624 = vpack.c.bf16 %v609, %v608
        %v625 = vpack.c.bf16 %v370, %v371
        %v626 = vpack.c.bf16 %v611, %v610
        %v627 = vpack.c.bf16 %v368, %v369
        %v628 = vpack.c.bf16 %v613, %v612
        %v629 = vpack.c.bf16 %v366, %v367
        %v630 = vpack.c.bf16 %v615, %v614
        %v631 = vpack.c.bf16 %v364, %v365
        %v632 = vpack.c.bf16 %v617, %v616
        %v633 = vpack.c.bf16 %v362, %v363
        %v634 = vpack.c.bf16 %v619, %v618
        %v635 = vpack.c.bf16 %v376, %v361
        %v636 = vld [vmem:[#allocation4] sm:$0xff]
        %v637 = vld [vmem:[#allocation4 + $0x8] sm:$0xf]
        %v638 = vld [vmem:[#allocation4 + $0xc] sm:$0xff]
        %v639 = vld [vmem:[#allocation4 + $0x14] sm:$0xf]
        %v640 = vld [vmem:[#allocation4 + $0x18] sm:$0xff]
        %v641 = vld [vmem:[#allocation4 + $0x20] sm:$0xf]
        %v642 = vld [vmem:[#allocation4 + $0x24] sm:$0xff]
        %v643 = vld [vmem:[#allocation4 + $0x2c] sm:$0xf]
        %v644 = vld [vmem:[#allocation4 + $0x30] sm:$0xff]
        %v645 = vld [vmem:[#allocation4 + $0x38] sm:$0xf]
        %v646 = vld [vmem:[#allocation4 + $0x3c] sm:$0xff]
        %v647 = vld [vmem:[#allocation4 + $0x44] sm:$0xf]
        %v648 = vld [vmem:[#allocation4 + $0x48] sm:$0xff]
        %v649 = vld [vmem:[#allocation4 + $0x50] sm:$0xf]
        %v650 = vld [vmem:[#allocation4 + $0x54] sm:$0xff]
        %v651 = vld [vmem:[#allocation4 + $0x5c] sm:$0xf]
        %v652 = vld [vmem:[#allocation4 + $0x60] sm:$0xff]
        %v653 = vld [vmem:[#allocation4 + $0x68] sm:$0xf]
        %v654 = vld [vmem:[#allocation4 + $0x6c] sm:$0xff]
        %v655 = vld [vmem:[#allocation4 + $0x74] sm:$0xf]
        %v656 = vld [vmem:[#allocation4 + $0x78] sm:$0xff]
        %v657 = vld [vmem:[#allocation4 + $0x80] sm:$0xf]
        %v658 = vld [vmem:[#allocation4 + $0x84] sm:$0xff]
        %v659 = vld [vmem:[#allocation4 + $0x8c] sm:$0xf]
        %v660 = vld [vmem:[#allocation4 + $0x90] sm:$0xff]
        %v661 = vld [vmem:[#allocation4 + $0x98] sm:$0xf]
        %v662 = vld [vmem:[#allocation4 + $0x9c] sm:$0xff]
        %v663 = vld [vmem:[#allocation4 + $0xa4] sm:$0xf]
        %v664 = vld [vmem:[#allocation4 + $0xa8] sm:$0xff]
        %v665 = vld [vmem:[#allocation4 + $0xb0] sm:$0xf]
        %v666 = vld [vmem:[#allocation4 + $0xb4] sm:$0xff]
        %v667 = vld [vmem:[#allocation4 + $0xbc] sm:$0xf]
        %v668 = vld [vmem:[#allocation4 + $0xc0] sm:$0xff]
        %v669 = vld [vmem:[#allocation4 + $0xc8] sm:$0xf]
        %v670 = vld [vmem:[#allocation4 + $0xcc] sm:$0xff]
        %v671 = vld [vmem:[#allocation4 + $0xd4] sm:$0xf]
        %v672 = vld [vmem:[#allocation4 + $0xd8] sm:$0xff]
        %v673 = vld [vmem:[#allocation4 + $0xe0] sm:$0xf]
        %v674 = vld [vmem:[#allocation4 + $0xe4] sm:$0xff]
        %v675 = vld [vmem:[#allocation4 + $0xec] sm:$0xf]
        %v716 = vunpack.c.l.b16 %v636
        %v717 = vunpack.c.h.b16 %v636
        %v718 = vunpack.c.l.b16 %v637
        %v719 = vunpack.c.l.b16 %v638
        %v720 = vunpack.c.h.b16 %v638
        %v721 = vunpack.c.l.b16 %v639
        %v722 = vunpack.c.l.b16 %v640
        %v723 = vunpack.c.h.b16 %v640
        %v724 = vunpack.c.l.b16 %v641
        %v725 = vunpack.c.l.b16 %v642
        %v726 = vunpack.c.h.b16 %v642
        %v727 = vunpack.c.l.b16 %v643
        %v728 = vunpack.c.l.b16 %v644
        %v729 = vunpack.c.h.b16 %v644
        %v730 = vunpack.c.l.b16 %v645
        %v731 = vunpack.c.l.b16 %v646
        %v732 = vunpack.c.h.b16 %v646
        %v733 = vunpack.c.l.b16 %v647
        %v734 = vunpack.c.l.b16 %v648
        %v735 = vunpack.c.h.b16 %v648
        %v736 = vunpack.c.l.b16 %v649
        %v737 = vunpack.c.l.b16 %v650
        %v738 = vunpack.c.h.b16 %v650
        %v739 = vunpack.c.l.b16 %v651
        %v740 = vunpack.c.l.b16 %v652
        %v741 = vunpack.c.h.b16 %v652
        %v742 = vunpack.c.l.b16 %v653
        %v743 = vunpack.c.l.b16 %v654
        %v744 = vunpack.c.h.b16 %v654
        %v745 = vunpack.c.l.b16 %v655
        %v746 = vunpack.c.l.b16 %v656
        %v747 = vunpack.c.h.b16 %v656
        %v748 = vunpack.c.l.b16 %v657
        %v749 = vunpack.c.l.b16 %v658
        %v750 = vunpack.c.h.b16 %v658
        %v751 = vunpack.c.l.b16 %v659
        %v752 = vunpack.c.l.b16 %v660
        %v753 = vunpack.c.h.b16 %v660
        %v754 = vunpack.c.l.b16 %v661
        %v755 = vunpack.c.l.b16 %v662
        %v756 = vunpack.c.h.b16 %v662
        %v757 = vunpack.c.l.b16 %v663
        %v758 = vunpack.c.l.b16 %v664
        %v759 = vunpack.c.h.b16 %v664
        %v760 = vunpack.c.l.b16 %v665
        %v761 = vunpack.c.l.b16 %v666
        %v762 = vunpack.c.h.b16 %v666
        %v763 = vunpack.c.l.b16 %v667
        %v764 = vunpack.c.l.b16 %v668
        %v765 = vunpack.c.h.b16 %v668
        %v766 = vunpack.c.l.b16 %v669
        %v767 = vunpack.c.l.b16 %v670
        %v768 = vunpack.c.h.b16 %v670
        %v769 = vunpack.c.l.b16 %v671
        %v770 = vunpack.c.l.b16 %v672
        %v771 = vunpack.c.h.b16 %v672
        %v772 = vunpack.c.l.b16 %v673
        %v773 = vunpack.c.l.b16 %v674
        %v774 = vunpack.c.h.b16 %v674
        %v775 = vunpack.c.l.b16 %v675
        %v776 = vpack.c.b16 %v719, %v716
        %v777 = vpack.c.b16 %v720, %v717
        %v778 = vpack.c.b16 %v721, %v718
        %v779 = vpack.c.b16 %v725, %v722
        %v780 = vpack.c.b16 %v726, %v723
        %v781 = vpack.c.b16 %v727, %v724
        %v782 = vpack.c.b16 %v731, %v728
        %v783 = vpack.c.b16 %v732, %v729
        %v784 = vpack.c.b16 %v733, %v730
        %v785 = vpack.c.b16 %v737, %v734
        %v786 = vpack.c.b16 %v738, %v735
        %v787 = vpack.c.b16 %v739, %v736
        %v788 = vpack.c.b16 %v743, %v740
        %v789 = vpack.c.b16 %v744, %v741
        %v790 = vpack.c.b16 %v745, %v742
        %v791 = vpack.c.b16 %v749, %v746
        %v792 = vpack.c.b16 %v750, %v747
        %v793 = vpack.c.b16 %v751, %v748
        %v794 = vpack.c.b16 %v755, %v752
        %v795 = vpack.c.b16 %v756, %v753
        %v796 = vpack.c.b16 %v757, %v754
        %v797 = vpack.c.b16 %v761, %v758
        %v798 = vpack.c.b16 %v762, %v759
        %v799 = vpack.c.b16 %v763, %v760
        %v800 = vpack.c.b16 %v767, %v764
        %v801 = vpack.c.b16 %v768, %v765
        %v802 = vpack.c.b16 %v769, %v766
        %v803 = vpack.c.b16 %v773, %v770
        %v804 = vpack.c.b16 %v774, %v771
        %v805 = vpack.c.b16 %v775, %v772
        %v837 = vsel %vm569, %v621, 0
        %v840 = vsel %vm569, %v623, 0
        %v843 = vsel %vm569, %v625, 0
        %v846 = vsel %vm569, %v627, 0
        %v849 = vsel %vm569, %v629, 0
        %v852 = vsel %vm569, %v631, 0
        %v855 = vsel %vm569, %v633, 0
        %v858 = vsel %vm569, %v635, 0
        %860 = vmatpush.bf16.msra.mxu0 %v797
        %861 = vmatpush.bf16.msra.mxu0 %v794
        %862 = vmatpush.bf16.msra.mxu0 %v791
        %863 = vmatpush.bf16.msra.mxu0 %v788
        %864 = vmatpush.bf16.msra.mxu0 %v785
        %865 = vmatpush.bf16.msra.mxu0 %v782
        %866 = vmatpush.bf16.msra.mxu0 %v779
        %867 = vmatpush.bf16.msra.mxu0 %v776
        %868 = vmatmul.bf16.gmra.mxu0 %v620
        %v869 = vpop.f32.mrf.mxu0
        %v870 = vadd.f32 0.0, %v869
        %v871 = vpop.f32.mrf.mxu0
        %v872 = vadd.f32 0.0, %v871
        %873 = vmatmul.bf16.gmra.mxu0 %v622
        %v874 = vpop.f32.mrf.mxu0
        %v875 = vadd.f32 0.0, %v874
        %v876 = vpop.f32.mrf.mxu0
        %v877 = vadd.f32 0.0, %v876
        %878 = vmatmul.bf16.gmra.mxu0 %v624
        %v879 = vpop.f32.mrf.mxu0
        %v880 = vadd.f32 0.0, %v879
        %v881 = vpop.f32.mrf.mxu0
        %v882 = vadd.f32 0.0, %v881
        %883 = vmatmul.bf16.gmra.mxu0 %v626
        %v884 = vpop.f32.mrf.mxu0
        %v885 = vadd.f32 0.0, %v884
        %v886 = vpop.f32.mrf.mxu0
        %v887 = vadd.f32 0.0, %v886
        %888 = vmatmul.bf16.gmra.mxu0 %v628
        %v889 = vpop.f32.mrf.mxu0
        %v890 = vadd.f32 0.0, %v889
        %v891 = vpop.f32.mrf.mxu0
        %v892 = vadd.f32 0.0, %v891
        %893 = vmatmul.bf16.gmra.mxu0 %v630
        %v894 = vpop.f32.mrf.mxu0
        %v895 = vadd.f32 0.0, %v894
        %v896 = vpop.f32.mrf.mxu0
        %v897 = vadd.f32 0.0, %v896
        %898 = vmatmul.bf16.gmra.mxu0 %v632
        %v899 = vpop.f32.mrf.mxu0
        %v900 = vadd.f32 0.0, %v899
        %v901 = vpop.f32.mrf.mxu0
        %v902 = vadd.f32 0.0, %v901
        %903 = vmatmul.bf16.gmra.mxu0 %v634
        %v904 = vpop.f32.mrf.mxu0
        %v905 = vadd.f32 0.0, %v904
        %v906 = vpop.f32.mrf.mxu0
        %v907 = vadd.f32 0.0, %v906
        %908 = vdwg.mxu0
        %909 = vmatpush.bf16.msra.mxu0 0
        %910 = vmatpush.bf16.msra.mxu0 0
        %911 = vmatpush.bf16.msra.mxu0 0
        %912 = vmatpush.bf16.msra.mxu0 0
        %913 = vmatpush.bf16.msra.mxu0 0
        %914 = vmatpush.bf16.msra.mxu0 0
        %915 = vmatpush.bf16.msra.mxu0 %v803
        %916 = vmatpush.bf16.msra.mxu0 %v800
        %917 = vmatmul.bf16.gmra.mxu0 %v837
        %v918 = vpop.f32.mrf.mxu0
        %v919 = vadd.f32 %v870, %v918
        %v920 = vpop.f32.mrf.mxu0
        %v921 = vadd.f32 %v872, %v920
        %922 = vmatmul.bf16.gmra.mxu0 %v840
        %v923 = vpop.f32.mrf.mxu0
        %v924 = vadd.f32 %v875, %v923
        %v925 = vpop.f32.mrf.mxu0
        %v926 = vadd.f32 %v877, %v925
        %927 = vmatmul.bf16.gmra.mxu0 %v843
        %v928 = vpop.f32.mrf.mxu0
        %v929 = vadd.f32 %v880, %v928
        %v930 = vpop.f32.mrf.mxu0
        %v931 = vadd.f32 %v882, %v930
        %932 = vmatmul.bf16.gmra.mxu0 %v846
        %v933 = vpop.f32.mrf.mxu0
        %v934 = vadd.f32 %v885, %v933
        %v935 = vpop.f32.mrf.mxu0
        %v936 = vadd.f32 %v887, %v935
        %937 = vmatmul.bf16.gmra.mxu0 %v849
        %v938 = vpop.f32.mrf.mxu0
        %v939 = vadd.f32 %v890, %v938
        %v940 = vpop.f32.mrf.mxu0
        %v941 = vadd.f32 %v892, %v940
        %942 = vmatmul.bf16.gmra.mxu0 %v852
        %v943 = vpop.f32.mrf.mxu0
        %v944 = vadd.f32 %v895, %v943
        %v945 = vpop.f32.mrf.mxu0
        %v946 = vadd.f32 %v897, %v945
        %947 = vmatmul.bf16.gmra.mxu0 %v855
        %v948 = vpop.f32.mrf.mxu0
        %v949 = vadd.f32 %v900, %v948
        %v950 = vpop.f32.mrf.mxu0
        %v951 = vadd.f32 %v902, %v950
        %952 = vmatmul.bf16.gmra.mxu0 %v858
        %v953 = vpop.f32.mrf.mxu0
        %v954 = vadd.f32 %v905, %v953
        %v955 = vpop.f32.mrf.mxu0
        %v956 = vadd.f32 %v907, %v955
        %957 = vdwg.mxu0
        %958 = vmatpush.bf16.msra.mxu0 %v798
        %959 = vmatpush.bf16.msra.mxu0 %v795
        %960 = vmatpush.bf16.msra.mxu0 %v792
        %961 = vmatpush.bf16.msra.mxu0 %v789
        %962 = vmatpush.bf16.msra.mxu0 %v786
        %963 = vmatpush.bf16.msra.mxu0 %v783
        %964 = vmatpush.bf16.msra.mxu0 %v780
        %965 = vmatpush.bf16.msra.mxu0 %v777
        %966 = vmatmul.bf16.gmra.mxu0 %v620
        %v967 = vpop.f32.mrf.mxu0
        %v968 = vadd.f32 0.0, %v967
        %v969 = vpop.f32.mrf.mxu0
        %v970 = vadd.f32 0.0, %v969
        %971 = vmatmul.bf16.gmra.mxu0 %v622
        %v972 = vpop.f32.mrf.mxu0
        %v973 = vadd.f32 0.0, %v972
        %v974 = vpop.f32.mrf.mxu0
        %v975 = vadd.f32 0.0, %v974
        %976 = vmatmul.bf16.gmra.mxu0 %v624
        %v977 = vpop.f32.mrf.mxu0
        %v978 = vadd.f32 0.0, %v977
        %v979 = vpop.f32.mrf.mxu0
        %v980 = vadd.f32 0.0, %v979
        %981 = vmatmul.bf16.gmra.mxu0 %v626
        %v982 = vpop.f32.mrf.mxu0
        %v983 = vadd.f32 0.0, %v982
        %v984 = vpop.f32.mrf.mxu0
        %v985 = vadd.f32 0.0, %v984
        %986 = vmatmul.bf16.gmra.mxu0 %v628
        %v987 = vpop.f32.mrf.mxu0
        %v988 = vadd.f32 0.0, %v987
        %v989 = vpop.f32.mrf.mxu0
        %v990 = vadd.f32 0.0, %v989
        %991 = vmatmul.bf16.gmra.mxu0 %v630
        %v992 = vpop.f32.mrf.mxu0
        %v993 = vadd.f32 0.0, %v992
        %v994 = vpop.f32.mrf.mxu0
        %v995 = vadd.f32 0.0, %v994
        %996 = vmatmul.bf16.gmra.mxu0 %v632
        %v997 = vpop.f32.mrf.mxu0
        %v998 = vadd.f32 0.0, %v997
        %v999 = vpop.f32.mrf.mxu0
        %v1000 = vadd.f32 0.0, %v999
        %1001 = vmatmul.bf16.gmra.mxu0 %v634
        %v1002 = vpop.f32.mrf.mxu0
        %v1003 = vadd.f32 0.0, %v1002
        %v1004 = vpop.f32.mrf.mxu0
        %v1005 = vadd.f32 0.0, %v1004
        %1006 = vdwg.mxu0
        %1007 = vmatpush.bf16.msra.mxu0 0
        %1008 = vmatpush.bf16.msra.mxu0 0
        %1009 = vmatpush.bf16.msra.mxu0 0
        %1010 = vmatpush.bf16.msra.mxu0 0
        %1011 = vmatpush.bf16.msra.mxu0 0
        %1012 = vmatpush.bf16.msra.mxu0 0
        %1013 = vmatpush.bf16.msra.mxu0 %v804
        %1014 = vmatpush.bf16.msra.mxu0 %v801
        %1015 = vmatmul.bf16.gmra.mxu0 %v837
        %v1016 = vpop.f32.mrf.mxu0
        %v1017 = vadd.f32 %v968, %v1016
        %v1018 = vpop.f32.mrf.mxu0
        %v1019 = vadd.f32 %v970, %v1018
        %1020 = vmatmul.bf16.gmra.mxu0 %v840
        %v1021 = vpop.f32.mrf.mxu0
        %v1022 = vadd.f32 %v973, %v1021
        %v1023 = vpop.f32.mrf.mxu0
        %v1024 = vadd.f32 %v975, %v1023
        %1025 = vmatmul.bf16.gmra.mxu0 %v843
        %v1026 = vpop.f32.mrf.mxu0
        %v1027 = vadd.f32 %v978, %v1026
        %v1028 = vpop.f32.mrf.mxu0
        %v1029 = vadd.f32 %v980, %v1028
        %1030 = vmatmul.bf16.gmra.mxu0 %v846
        %v1031 = vpop.f32.mrf.mxu0
        %v1032 = vadd.f32 %v983, %v1031
        %v1033 = vpop.f32.mrf.mxu0
        %v1034 = vadd.f32 %v985, %v1033
        %1035 = vmatmul.bf16.gmra.mxu0 %v849
        %v1036 = vpop.f32.mrf.mxu0
        %v1037 = vadd.f32 %v988, %v1036
        %v1038 = vpop.f32.mrf.mxu0
        %v1039 = vadd.f32 %v990, %v1038
        %1040 = vmatmul.bf16.gmra.mxu0 %v852
        %v1041 = vpop.f32.mrf.mxu0
        %v1042 = vadd.f32 %v993, %v1041
        %v1043 = vpop.f32.mrf.mxu0
        %v1044 = vadd.f32 %v995, %v1043
        %1045 = vmatmul.bf16.gmra.mxu0 %v855
        %v1046 = vpop.f32.mrf.mxu0
        %v1047 = vadd.f32 %v998, %v1046
        %v1048 = vpop.f32.mrf.mxu0
        %v1049 = vadd.f32 %v1000, %v1048
        %1050 = vmatmul.bf16.gmra.mxu0 %v858
        %v1051 = vpop.f32.mrf.mxu0
        %v1052 = vadd.f32 %v1003, %v1051
        %v1053 = vpop.f32.mrf.mxu0
        %v1054 = vadd.f32 %v1005, %v1053
        %1055 = vdwg.mxu0
        %1056 = vmatpush.bf16.msra.mxu0 %v799
        %1057 = vmatpush.bf16.msra.mxu0 %v796
        %1058 = vmatpush.bf16.msra.mxu0 %v793
        %1059 = vmatpush.bf16.msra.mxu0 %v790
        %1060 = vmatpush.bf16.msra.mxu0 %v787
        %1061 = vmatpush.bf16.msra.mxu0 %v784
        %1062 = vmatpush.bf16.msra.mxu0 %v781
        %1063 = vmatpush.bf16.msra.mxu0 %v778
        %1064 = vmatmul.bf16.gmra.mxu0 %v620
        %v1065 = vpop.f32.mrf.mxu0
        %v1066 = vadd.f32 0.0, %v1065
        %v1067 = vpop.f32.mrf.mxu0
        %v1068 = vadd.f32 0.0, %v1067
        %1069 = vmatmul.bf16.gmra.mxu0 %v622
        %v1070 = vpop.f32.mrf.mxu0
        %v1071 = vadd.f32 0.0, %v1070
        %v1072 = vpop.f32.mrf.mxu0
        %v1073 = vadd.f32 0.0, %v1072
        %1074 = vmatmul.bf16.gmra.mxu0 %v624
        %v1075 = vpop.f32.mrf.mxu0
        %v1076 = vadd.f32 0.0, %v1075
        %v1077 = vpop.f32.mrf.mxu0
        %v1078 = vadd.f32 0.0, %v1077
        %1079 = vmatmul.bf16.gmra.mxu0 %v626
        %v1080 = vpop.f32.mrf.mxu0
        %v1081 = vadd.f32 0.0, %v1080
        %v1082 = vpop.f32.mrf.mxu0
        %v1083 = vadd.f32 0.0, %v1082
        %1084 = vmatmul.bf16.gmra.mxu0 %v628
        %v1085 = vpop.f32.mrf.mxu0
        %v1086 = vadd.f32 0.0, %v1085
        %v1087 = vpop.f32.mrf.mxu0
        %v1088 = vadd.f32 0.0, %v1087
        %1089 = vmatmul.bf16.gmra.mxu0 %v630
        %v1090 = vpop.f32.mrf.mxu0
        %v1091 = vadd.f32 0.0, %v1090
        %v1092 = vpop.f32.mrf.mxu0
        %v1093 = vadd.f32 0.0, %v1092
        %1094 = vmatmul.bf16.gmra.mxu0 %v632
        %v1095 = vpop.f32.mrf.mxu0
        %v1096 = vadd.f32 0.0, %v1095
        %v1097 = vpop.f32.mrf.mxu0
        %v1098 = vadd.f32 0.0, %v1097
        %1099 = vmatmul.bf16.gmra.mxu0 %v634
        %v1100 = vpop.f32.mrf.mxu0
        %v1101 = vadd.f32 0.0, %v1100
        %v1102 = vpop.f32.mrf.mxu0
        %v1103 = vadd.f32 0.0, %v1102
        %1104 = vdwg.mxu0
        %1105 = vmatpush.bf16.msra.mxu0 0
        %1106 = vmatpush.bf16.msra.mxu0 0
        %1107 = vmatpush.bf16.msra.mxu0 0
        %1108 = vmatpush.bf16.msra.mxu0 0
        %1109 = vmatpush.bf16.msra.mxu0 0
        %1110 = vmatpush.bf16.msra.mxu0 0
        %1111 = vmatpush.bf16.msra.mxu0 %v805
        %1112 = vmatpush.bf16.msra.mxu0 %v802
        %1113 = vmatmul.bf16.gmra.mxu0 %v837
        %v1114 = vpop.f32.mrf.mxu0
        %v1115 = vadd.f32 %v1066, %v1114
        %v1116 = vpop.f32.mrf.mxu0
        %v1117 = vadd.f32 %v1068, %v1116
        %1118 = vmatmul.bf16.gmra.mxu0 %v840
        %v1119 = vpop.f32.mrf.mxu0
        %v1120 = vadd.f32 %v1071, %v1119
        %v1121 = vpop.f32.mrf.mxu0
        %v1122 = vadd.f32 %v1073, %v1121
        %1123 = vmatmul.bf16.gmra.mxu0 %v843
        %v1124 = vpop.f32.mrf.mxu0
        %v1125 = vadd.f32 %v1076, %v1124
        %v1126 = vpop.f32.mrf.mxu0
        %v1127 = vadd.f32 %v1078, %v1126
        %1128 = vmatmul.bf16.gmra.mxu0 %v846
        %v1129 = vpop.f32.mrf.mxu0
        %v1130 = vadd.f32 %v1081, %v1129
        %v1131 = vpop.f32.mrf.mxu0
        %v1132 = vadd.f32 %v1083, %v1131
        %1133 = vmatmul.bf16.gmra.mxu0 %v849
        %v1134 = vpop.f32.mrf.mxu0
        %v1135 = vadd.f32 %v1086, %v1134
        %v1136 = vpop.f32.mrf.mxu0
        %v1137 = vadd.f32 %v1088, %v1136
        %1138 = vmatmul.bf16.gmra.mxu0 %v852
        %v1139 = vpop.f32.mrf.mxu0
        %v1140 = vadd.f32 %v1091, %v1139
        %v1141 = vpop.f32.mrf.mxu0
        %v1142 = vadd.f32 %v1093, %v1141
        %1143 = vmatmul.bf16.gmra.mxu0 %v855
        %v1144 = vpop.f32.mrf.mxu0
        %v1145 = vadd.f32 %v1096, %v1144
        %v1146 = vpop.f32.mrf.mxu0
        %v1147 = vadd.f32 %v1098, %v1146
        %1148 = vmatmul.bf16.gmra.mxu0 %v858
        %v1149 = vpop.f32.mrf.mxu0
        %v1150 = vadd.f32 %v1101, %v1149
        %v1151 = vpop.f32.mrf.mxu0
        %v1152 = vadd.f32 %v1103, %v1151
        %1153 = vdwg.mxu0
        %v1154 = vadd.s32 %v260, 8
        %vm1155 = vcmp.le.s32.totalorder %v260, 13
        %vm1156 = vcmp.le.s32.totalorder %v1154, 13
        %v1157 = vsel %vm1155, 1, 0
        %v1158 = vsel %vm1156, 1, 0
        %vm1159 = vcmp.eq.s32.totalorder %v1157, 1
        %vm1160 = vcmp.eq.s32.totalorder %v1158, 1
        %v1161 = vsel %vm1159, %v919, -inf
        %v1162 = vsel %vm1160, %v921, -inf
        %v1163 = vsel %vm1159, %v924, -inf
        %v1164 = vsel %vm1160, %v926, -inf
        %v1165 = vsel %vm1159, %v929, -inf
        %v1166 = vsel %vm1160, %v931, -inf
        %v1167 = vsel %vm1159, %v934, -inf
        %v1168 = vsel %vm1160, %v936, -inf
        %v1169 = vsel %vm1159, %v939, -inf
        %v1170 = vsel %vm1160, %v941, -inf
        %v1171 = vsel %vm1159, %v944, -inf
        %v1172 = vsel %vm1160, %v946, -inf
        %v1173 = vsel %vm1159, %v949, -inf
        %v1174 = vsel %vm1160, %v951, -inf
        %v1175 = vsel %vm1159, %v954, -inf
        %v1176 = vsel %vm1160, %v956, -inf
        %v1177 = vmax.f32 %v1161, %v1162
        %v1178 = vrot.slane %v1177, 4
        %v1179 = vmax.f32 %v1177, %v1178
        %v1180 = vrot.slane %v1179, 2
        %v1181 = vmax.f32 %v1179, %v1180
        %v1182 = vrot.slane %v1181, 1
        %v1183 = vmax.f32 %v1181, %v1182
        %v1184 = vmax.f32 %v1163, %v1164
        %v1185 = vrot.slane %v1184, 4
        %v1186 = vmax.f32 %v1184, %v1185
        %v1187 = vrot.slane %v1186, 2
        %v1188 = vmax.f32 %v1186, %v1187
        %v1189 = vrot.slane %v1188, 1
        %v1190 = vmax.f32 %v1188, %v1189
        %v1191 = vmax.f32 %v1165, %v1166
        %v1192 = vrot.slane %v1191, 4
        %v1193 = vmax.f32 %v1191, %v1192
        %v1194 = vrot.slane %v1193, 2
        %v1195 = vmax.f32 %v1193, %v1194
        %v1196 = vrot.slane %v1195, 1
        %v1197 = vmax.f32 %v1195, %v1196
        %v1198 = vmax.f32 %v1167, %v1168
        %v1199 = vrot.slane %v1198, 4
        %v1200 = vmax.f32 %v1198, %v1199
        %v1201 = vrot.slane %v1200, 2
        %v1202 = vmax.f32 %v1200, %v1201
        %v1203 = vrot.slane %v1202, 1
        %v1204 = vmax.f32 %v1202, %v1203
        %v1205 = vmax.f32 %v1169, %v1170
        %v1206 = vrot.slane %v1205, 4
        %v1207 = vmax.f32 %v1205, %v1206
        %v1208 = vrot.slane %v1207, 2
        %v1209 = vmax.f32 %v1207, %v1208
        %v1210 = vrot.slane %v1209, 1
        %v1211 = vmax.f32 %v1209, %v1210
        %v1212 = vmax.f32 %v1171, %v1172
        %v1213 = vrot.slane %v1212, 4
        %v1214 = vmax.f32 %v1212, %v1213
        %v1215 = vrot.slane %v1214, 2
        %v1216 = vmax.f32 %v1214, %v1215
        %v1217 = vrot.slane %v1216, 1
        %v1218 = vmax.f32 %v1216, %v1217
        %v1219 = vmax.f32 %v1173, %v1174
        %v1220 = vrot.slane %v1219, 4
        %v1221 = vmax.f32 %v1219, %v1220
        %v1222 = vrot.slane %v1221, 2
        %v1223 = vmax.f32 %v1221, %v1222
        %v1224 = vrot.slane %v1223, 1
        %v1225 = vmax.f32 %v1223, %v1224
        %v1226 = vmax.f32 %v1175, %v1176
        %v1227 = vrot.slane %v1226, 4
        %v1228 = vmax.f32 %v1226, %v1227
        %v1229 = vrot.slane %v1228, 2
        %v1230 = vmax.f32 %v1228, %v1229
        %v1231 = vrot.slane %v1230, 1
        %v1232 = vmax.f32 %v1230, %v1231
        %vm1233 = vcmp.le.s32.totalorder %v260, 12
        %vm1234 = vcmp.le.s32.totalorder %v1154, 12
        %v1235 = vsel %vm1233, 1, 0
        %v1236 = vsel %vm1234, 1, 0
        %vm1237 = vcmp.eq.s32.totalorder %v1235, 1
        %vm1238 = vcmp.eq.s32.totalorder %v1236, 1
        %v1239 = vsel %vm1237, %v1017, -inf
        %v1240 = vsel %vm1238, %v1019, -inf
        %v1241 = vsel %vm1237, %v1022, -inf
        %v1242 = vsel %vm1238, %v1024, -inf
        %v1243 = vsel %vm1237, %v1027, -inf
        %v1244 = vsel %vm1238, %v1029, -inf
        %v1245 = vsel %vm1237, %v1032, -inf
        %v1246 = vsel %vm1238, %v1034, -inf
        %v1247 = vsel %vm1237, %v1037, -inf
        %v1248 = vsel %vm1238, %v1039, -inf
        %v1249 = vsel %vm1237, %v1042, -inf
        %v1250 = vsel %vm1238, %v1044, -inf
        %v1251 = vsel %vm1237, %v1047, -inf
        %v1252 = vsel %vm1238, %v1049, -inf
        %v1253 = vsel %vm1237, %v1052, -inf
        %v1254 = vsel %vm1238, %v1054, -inf
        %v1255 = vmax.f32 %v1239, %v1240
        %v1256 = vrot.slane %v1255, 4
        %v1257 = vmax.f32 %v1255, %v1256
        %v1258 = vrot.slane %v1257, 2
        %v1259 = vmax.f32 %v1257, %v1258
        %v1260 = vrot.slane %v1259, 1
        %v1261 = vmax.f32 %v1259, %v1260
        %v1262 = vmax.f32 %v1241, %v1242
        %v1263 = vrot.slane %v1262, 4
        %v1264 = vmax.f32 %v1262, %v1263
        %v1265 = vrot.slane %v1264, 2
        %v1266 = vmax.f32 %v1264, %v1265
        %v1267 = vrot.slane %v1266, 1
        %v1268 = vmax.f32 %v1266, %v1267
        %v1269 = vmax.f32 %v1243, %v1244
        %v1270 = vrot.slane %v1269, 4
        %v1271 = vmax.f32 %v1269, %v1270
        %v1272 = vrot.slane %v1271, 2
        %v1273 = vmax.f32 %v1271, %v1272
        %v1274 = vrot.slane %v1273, 1
        %v1275 = vmax.f32 %v1273, %v1274
        %v1276 = vmax.f32 %v1245, %v1246
        %v1277 = vrot.slane %v1276, 4
        %v1278 = vmax.f32 %v1276, %v1277
        %v1279 = vrot.slane %v1278, 2
        %v1280 = vmax.f32 %v1278, %v1279
        %v1281 = vrot.slane %v1280, 1
        %v1282 = vmax.f32 %v1280, %v1281
        %v1283 = vmax.f32 %v1247, %v1248
        %v1284 = vrot.slane %v1283, 4
        %v1285 = vmax.f32 %v1283, %v1284
        %v1286 = vrot.slane %v1285, 2
        %v1287 = vmax.f32 %v1285, %v1286
        %v1288 = vrot.slane %v1287, 1
        %v1289 = vmax.f32 %v1287, %v1288
        %v1290 = vmax.f32 %v1249, %v1250
        %v1291 = vrot.slane %v1290, 4
        %v1292 = vmax.f32 %v1290, %v1291
        %v1293 = vrot.slane %v1292, 2
        %v1294 = vmax.f32 %v1292, %v1293
        %v1295 = vrot.slane %v1294, 1
        %v1296 = vmax.f32 %v1294, %v1295
        %v1297 = vmax.f32 %v1251, %v1252
        %v1298 = vrot.slane %v1297, 4
        %v1299 = vmax.f32 %v1297, %v1298
        %v1300 = vrot.slane %v1299, 2
        %v1301 = vmax.f32 %v1299, %v1300
        %v1302 = vrot.slane %v1301, 1
        %v1303 = vmax.f32 %v1301, %v1302
        %v1304 = vmax.f32 %v1253, %v1254
        %v1305 = vrot.slane %v1304, 4
        %v1306 = vmax.f32 %v1304, %v1305
        %v1307 = vrot.slane %v1306, 2
        %v1308 = vmax.f32 %v1306, %v1307
        %v1309 = vrot.slane %v1308, 1
        %v1310 = vmax.f32 %v1308, %v1309
        %vm1311 = vcmp.le.s32.totalorder %v260, 11
        %vm1312 = vcmp.le.s32.totalorder %v1154, 11
        %v1313 = vsel %vm1311, 1, 0
        %v1314 = vsel %vm1312, 1, 0
        %vm1315 = vcmp.eq.s32.totalorder %v1313, 1
        %vm1316 = vcmp.eq.s32.totalorder %v1314, 1
        %v1317 = vsel %vm1315, %v1115, -inf
        %v1318 = vsel %vm1316, %v1117, -inf
        %v1319 = vsel %vm1315, %v1120, -inf
        %v1320 = vsel %vm1316, %v1122, -inf
        %v1321 = vsel %vm1315, %v1125, -inf
        %v1322 = vsel %vm1316, %v1127, -inf
        %v1323 = vsel %vm1315, %v1130, -inf
        %v1324 = vsel %vm1316, %v1132, -inf
        %v1325 = vsel %vm1315, %v1135, -inf
        %v1326 = vsel %vm1316, %v1137, -inf
        %v1327 = vsel %vm1315, %v1140, -inf
        %v1328 = vsel %vm1316, %v1142, -inf
        %v1329 = vsel %vm1315, %v1145, -inf
        %v1330 = vsel %vm1316, %v1147, -inf
        %v1331 = vsel %vm1315, %v1150, -inf
        %v1332 = vsel %vm1316, %v1152, -inf
        %v1333 = vmax.f32 %v1317, %v1318
        %v1334 = vrot.slane %v1333, 4
        %v1335 = vmax.f32 %v1333, %v1334
        %v1336 = vrot.slane %v1335, 2
        %v1337 = vmax.f32 %v1335, %v1336
        %v1338 = vrot.slane %v1337, 1
        %v1339 = vmax.f32 %v1337, %v1338
        %v1340 = vmax.f32 %v1319, %v1320
        %v1341 = vrot.slane %v1340, 4
        %v1342 = vmax.f32 %v1340, %v1341
        %v1343 = vrot.slane %v1342, 2
        %v1344 = vmax.f32 %v1342, %v1343
        %v1345 = vrot.slane %v1344, 1
        %v1346 = vmax.f32 %v1344, %v1345
        %v1347 = vmax.f32 %v1321, %v1322
        %v1348 = vrot.slane %v1347, 4
        %v1349 = vmax.f32 %v1347, %v1348
        %v1350 = vrot.slane %v1349, 2
        %v1351 = vmax.f32 %v1349, %v1350
        %v1352 = vrot.slane %v1351, 1
        %v1353 = vmax.f32 %v1351, %v1352
        %v1354 = vmax.f32 %v1323, %v1324
        %v1355 = vrot.slane %v1354, 4
        %v1356 = vmax.f32 %v1354, %v1355
        %v1357 = vrot.slane %v1356, 2
        %v1358 = vmax.f32 %v1356, %v1357
        %v1359 = vrot.slane %v1358, 1
        %v1360 = vmax.f32 %v1358, %v1359
        %v1361 = vmax.f32 %v1325, %v1326
        %v1362 = vrot.slane %v1361, 4
        %v1363 = vmax.f32 %v1361, %v1362
        %v1364 = vrot.slane %v1363, 2
        %v1365 = vmax.f32 %v1363, %v1364
        %v1366 = vrot.slane %v1365, 1
        %v1367 = vmax.f32 %v1365, %v1366
        %v1368 = vmax.f32 %v1327, %v1328
        %v1369 = vrot.slane %v1368, 4
        %v1370 = vmax.f32 %v1368, %v1369
        %v1371 = vrot.slane %v1370, 2
        %v1372 = vmax.f32 %v1370, %v1371
        %v1373 = vrot.slane %v1372, 1
        %v1374 = vmax.f32 %v1372, %v1373
        %v1375 = vmax.f32 %v1329, %v1330
        %v1376 = vrot.slane %v1375, 4
        %v1377 = vmax.f32 %v1375, %v1376
        %v1378 = vrot.slane %v1377, 2
        %v1379 = vmax.f32 %v1377, %v1378
        %v1380 = vrot.slane %v1379, 1
        %v1381 = vmax.f32 %v1379, %v1380
        %v1382 = vmax.f32 %v1331, %v1332
        %v1383 = vrot.slane %v1382, 4
        %v1384 = vmax.f32 %v1382, %v1383
        %v1385 = vrot.slane %v1384, 2
        %v1386 = vmax.f32 %v1384, %v1385
        %v1387 = vrot.slane %v1386, 1
        %v1388 = vmax.f32 %v1386, %v1387
        %vm1397 = vcmask 1041409
        %v1398 = vsel %vm1397, %v1190, %v1183
        %vm1399 = vcmask 1042434
        %v1400 = vsel %vm1399, %v1197, %v1398
        %vm1401 = vcmask 1043459
        %v1402 = vsel %vm1401, %v1204, %v1400
        %vm1403 = vcmask 1044484
        %v1404 = vsel %vm1403, %v1211, %v1402
        %vm1405 = vcmask 1045509
        %v1406 = vsel %vm1405, %v1218, %v1404
        %vm1407 = vcmask 1046534
        %v1408 = vsel %vm1407, %v1225, %v1406
        %vm1409 = vcmask 1047559
        %v1410 = vsel %vm1409, %v1232, %v1408
        %v1420 = vsel %vm1397, %v1268, %v1261
        %v1421 = vsel %vm1399, %v1275, %v1420
        %v1422 = vsel %vm1401, %v1282, %v1421
        %v1423 = vsel %vm1403, %v1289, %v1422
        %v1424 = vsel %vm1405, %v1296, %v1423
        %v1425 = vsel %vm1407, %v1303, %v1424
        %v1426 = vsel %vm1409, %v1310, %v1425
        %v1436 = vsel %vm1397, %v1346, %v1339
        %v1437 = vsel %vm1399, %v1353, %v1436
        %v1438 = vsel %vm1401, %v1360, %v1437
        %v1439 = vsel %vm1403, %v1367, %v1438
        %v1440 = vsel %vm1405, %v1374, %v1439
        %v1441 = vsel %vm1407, %v1381, %v1440
        %v1442 = vsel %vm1409, %v1388, %v1441
        %v1444 = vld [vmem:[#allocation6] sm:$0x7]
        %v1446 = vperm.slane %v1444, 0
        %v1447 = vperm.slane %v1444, 1
        %v1448 = vperm.slane %v1444, 2
        %v1452 = vadd.f32 %v1410, %v1446
        %v1453 = vadd.f32 %v1426, %v1447
        %v1454 = vadd.f32 %v1442, %v1448
        %1455 = vst [vmem:[%s225] sm:$0xff] %v1452
        %1456 = vst [vmem:[%s225 + $0x8] sm:$0xff] %v1453
        %1457 = vst [vmem:[%s225 + $0x10] sm:$0xff] %v1454
        %p1458 = scmp.lt.s32.totalorder %s18, 1
        %s1459 = scalar_select %p1458, %s18, 1
        %s1460 = smul.addr %s1459, 3
        %s1461 = smul.addr %s1460, 8
        %s1462 = scalar_lea.vmem %s3, %s1461
        // Predicated region
        $region45: #{_lambda_.1} parent=31 // pred_check
          %p1463 = pneg %p104
        $region46: #{_lambda_.1} parent=31 // pred_check_branch
          %1465 = sbr.rel (%p1463) target = $region48
        $region47: #{_lambda_.1} parent=31 // pred_region
          _
        $region48: #{_lambda_.1} parent=31 // pred_fallthru
          _
      $region32: #{_lambda_.1} parent=5 // pred_fallthru
        _
      %p1466 = scmp.le.s32.totalorder 2, %s13
      // Predicated region
      $region49: #{_lambda_.1} parent=5 // pred_check
        %p1467 = pneg %p1466
      $region50: #{_lambda_.1} parent=5 // pred_check_branch
        %1469 = sbr.rel (%p1467) target = $region52
      $region51: #{_lambda_.1} parent=5 // pred_region
        %s1470 = ssub.s32 %s13, 2
        // Predicated region
        $region53: #{_lambda_.1} parent=51 // pred_check
          %p1471 = pneg %p110
        $region54: #{_lambda_.1} parent=51 // pred_check_branch
          %1473 = sbr.rel (%p1471) target = $region56
        $region55: #{_lambda_.1} parent=51 // pred_region
          %p1474 = scmp.lt.s32.totalorder %s19, 1
          %s1475 = scalar_select %p1474, %s19, 1
          %s1476 = smul.addr %s1475, 3
          %s1477 = smul.addr %s1476, 8
          %s1478 = scalar_lea.vmem %s3, %s1477
        $region56: #{_lambda_.1} parent=51 // pred_fallthru
          _
      $region52: #{_lambda_.1} parent=5 // pred_fallthru
        _
    $region6: #{_lambda_.1} parent=1 // loop_footer
      %s17 = sadd.s32 1, %s13
    $region7: #{_lambda_.1} parent=1 // loop_footer_branch
      %12 = sbr.rel target = $region3
    $region8: #{_lambda_.1} parent=1 // loop_exit
      _
    %1479 = vsyncpa [#allocation3], 1
    %s1480 = scalar_lea.sflag [#allocation3], 1
    %1481 = vsyncpa %s1480, 1
    %1482 = vsyncpa [#allocation5], 1

</llo_original>
